<compile_context>
chip_gen: v7x
topology: tpu7x:2x2x1
jax: 0.10.0
libtpu: 0.0.40
codegen_flags: <defaults>
</compile_context>

<pallas_src>
import math
import functools

import numpy as np
import jax
import jax.numpy as jnp
from jax.experimental import pallas as pl
from jax.experimental.pallas import tpu as pltpu


# ----------------------------------------------------------------------------
# Pallas kernel
# ----------------------------------------------------------------------------

def _sinusoidal_pos_emb_kernel(x_ref, c_ref, out_ref, *, pack):
    """One row-tile of (lane-packed) sinusoidal embeddings.

    x_ref:   (bt, pack)    f32 timesteps (pack logical rows per physical row)
    c_ref:   (pack+1, L)   f32 constants; rows 0..pack-1 are frequency rows
                           masked to lane-group j, row `pack` is the phase
                           (0 for the sin half, pi/2 for the cos half).
    out_ref: (bt, L)       embeddings, L = pack * dim (row-major packed view).
    """
    c = c_ref[...]                                  # (pack+1, L), resident
    xk = x_ref[...]                                 # (bt, pack)
    e = c[pack:pack + 1, :]                         # phase row, (1, L)
    for j in range(pack):                           # static unroll, pack <= 4
        e = e + xk[:, j:j + 1] * c[j:j + 1, :]      # lane-broadcast mul-add
    # Single transcendental per element: cos(z) == sin(z + pi/2).
    out_ref[...] = jnp.sin(e).astype(out_ref.dtype)


# ----------------------------------------------------------------------------
# Wrapper
# ----------------------------------------------------------------------------

def sinusoidal_pos_emb(x, dim, *, out_dtype=jnp.float32,
                       target_block_bytes=2 << 20,
                       max_rows_single_block=1024):
    """Pallas TPU equivalent of PyTorch SinusoidalPosEmb(dim).forward(x).

    x: (B,) array of timesteps -> (B, dim) embeddings
       out[:, :dim//2] = sin(x * f_k), out[:, dim//2:] = cos(x * f_k),
       f_k = 10000 ** (-k / (dim//2 - 1)).
    """
    assert dim % 2 == 0 and dim >= 4, "dim must be an even number >= 4"
    half = dim // 2
    B = int(x.shape[0])

    # Lane packing so the stored last dim is a dense multiple of 128.
    pack = 128 // dim if (dim < 128 and 128 % dim == 0) else 1
    L = pack * dim

    # Host-side constants (fully hoisted out of the per-step kernel body).
    k = np.arange(dim)
    cexp = np.where(k < half, k, k - half).astype(np.float64)
    freq = np.exp(cexp * (-math.log(10000.0) / (half - 1))).astype(np.float32)
    phase = np.where(k < half, 0.0, np.pi / 2.0).astype(np.float32)
    const = np.zeros((pack + 1, L), np.float32)
    for j in range(pack):
        const[j, j * dim:(j + 1) * dim] = freq      # freq row masked to group j
    const[pack, :] = np.tile(phase, pack)           # phase row
    const = jnp.asarray(const)

    # Row tiling of the packed (R, L) output view.
    R = pl.cdiv(B, pack)
    if R <= max_rows_single_block:
        # One full-shape block: (8,128) rule waived, no padding copies.
        # TODO(synk): at this size the op is launch/step-overhead bound; fuse
        # the embedding into its consumer (e.g. the timestep MLP) if possible.
        bt, Rp = R, R
    else:
        bt = max(8, (target_block_bytes // (L * 4)) // 8 * 8)
        bt = min(bt, ((R + 1) // 2 + 7) // 8 * 8)    # >= 2 steps for megacore
        Rp = pl.cdiv(R, bt) * bt

    xf = x.astype(jnp.float32).reshape(B)
    if Rp * pack != B:
        xf = jnp.pad(xf, (0, Rp * pack - B))
    x2 = xf.reshape(Rp, pack)                        # free row-major reshape

    kernel = functools.partial(_sinusoidal_pos_emb_kernel, pack=pack)
    out = pl.pallas_call(
        kernel,
        out_shape=jax.ShapeDtypeStruct((Rp, L), out_dtype),
        grid=(Rp // bt,),
        in_specs=[pl.BlockSpec((bt, pack), lambda i: (i, 0)),
                  pl.BlockSpec((pack + 1, L), lambda i: (0, 0))],  # resident
        out_specs=pl.BlockSpec((bt, L), lambda i: (i, 0)),
        compiler_params=pltpu.CompilerParams(
            dimension_semantics=("parallel",),
            vmem_limit_bytes=32 * 1024 * 1024),
    )(x2, const)

    out = out.reshape(Rp * pack, dim)                # free un-packing view
    return out[:B] if Rp * pack != B else out


# ----------------------------------------------------------------------------
# Pure-JAX reference (matches the PyTorch module exactly)
# ----------------------------------------------------------------------------

def sinusoidal_pos_emb_ref(x, dim):
    half = dim // 2
    scale = math.log(10000.0) / (half - 1)
    freqs = jnp.exp(jnp.arange(half, dtype=jnp.float32) * -scale)
    e = x.astype(jnp.float32)[:, None] * freqs[None, :]
    return jnp.concatenate([jnp.sin(e), jnp.cos(e)], axis=-1)


def _check(x, dim, **kw):
    out = jax.block_until_ready(sinusoidal_pos_emb(x, dim, **kw))
    ref = sinusoidal_pos_emb_ref(x, dim)
    assert out.shape == ref.shape, (out.shape, ref.shape)
    assert bool(jnp.all(jnp.isfinite(out))), "non-finite output"
    assert bool(jnp.allclose(out, ref, atol=2e-3, rtol=1e-3)), \
        float(jnp.max(jnp.abs(out - ref)))
    return out


# ----------------------------------------------------------------------------
# Main
# ----------------------------------------------------------------------------

if __name__ == "__main__":
    key = jax.random.PRNGKey(0)
    k0, k1, k2 = jax.random.split(key, 3)
    # Diffusion-style timesteps in [0, 1000).
    x8 = jax.random.uniform(k0, (8,), jnp.float32, 0.0, 1000.0)
    x10 = jax.random.uniform(k1, (10,), jnp.float32, 0.0, 1000.0)
    x64 = jax.random.uniform(k2, (64,), jnp.float32, 0.0, 1000.0)

    _check(x8, 32)                               # packed (dim<128), 1 block
    _check(x10, 32)                              # batch not a multiple of pack
    _check(x64, 32, max_rows_single_block=4)     # multi-step tiled grid path
    _check(x8, 256)                              # dim >= 128, pack = 1 path
    print("KERNEL_OK")
</pallas_src>

<mosaic_0001>
module attributes {stable_mosaic.version = 11 : i64} {
  func.func @_sinusoidal_pos_emb_kernel(%arg0: i32, %arg1: memref<2x4xf32, #tpu.memory_space<vmem>>, %arg2: memref<5x128xf32, #tpu.memory_space<vmem>>, %arg3: memref<2x128xf32, #tpu.memory_space<vmem>>) attributes {dimension_semantics = [#tpu.dimension_semantics<parallel>], iteration_bounds = array<i64: 1>, scalar_prefetch = 0 : i64, scratch_operands = 0 : i64, tpu.core_type = #tpu.core_type<tc>, window_params = [{transform_indices = @transform_0, window_bounds = array<i64: 2, 4>}, {pipeline_mode = #tpu.pipeline_mode<synchronous>, transform_indices = @transform_1, window_bounds = array<i64: 5, 128>}, {transform_indices = @transform_2, window_bounds = array<i64: 2, 128>}]} {
    %c0 = arith.constant 0 : index
    %c0_0 = arith.constant 0 : index
    %0 = vector.load %arg2[%c0, %c0_0] : memref<5x128xf32, #tpu.memory_space<vmem>>, vector<5x128xf32>
    %c0_1 = arith.constant 0 : index
    %c0_2 = arith.constant 0 : index
    %1 = vector.load %arg1[%c0_1, %c0_2] : memref<2x4xf32, #tpu.memory_space<vmem>>, vector<2x4xf32>
    %2 = vector.extract_strided_slice %0 {offsets = [4, 0], sizes = [1, 128], strides = [1, 1]} : vector<5x128xf32> to vector<1x128xf32>
    %3 = vector.extract_strided_slice %1 {offsets = [0, 0], sizes = [2, 1], strides = [1, 1]} : vector<2x4xf32> to vector<2x1xf32>
    %4 = vector.extract_strided_slice %0 {offsets = [0, 0], sizes = [1, 128], strides = [1, 1]} : vector<5x128xf32> to vector<1x128xf32>
    %5 = vector.broadcast %3 : vector<2x1xf32> to vector<2x128xf32>
    %6 = vector.broadcast %4 : vector<1x128xf32> to vector<2x128xf32>
    %7 = arith.mulf %5, %6 : vector<2x128xf32>
    %8 = vector.broadcast %2 : vector<1x128xf32> to vector<2x128xf32>
    %9 = arith.addf %8, %7 : vector<2x128xf32>
    %10 = vector.extract_strided_slice %1 {offsets = [0, 1], sizes = [2, 1], strides = [1, 1]} : vector<2x4xf32> to vector<2x1xf32>
    %11 = vector.extract_strided_slice %0 {offsets = [1, 0], sizes = [1, 128], strides = [1, 1]} : vector<5x128xf32> to vector<1x128xf32>
    %12 = vector.broadcast %10 : vector<2x1xf32> to vector<2x128xf32>
    %13 = vector.broadcast %11 : vector<1x128xf32> to vector<2x128xf32>
    %14 = arith.mulf %12, %13 : vector<2x128xf32>
    %15 = arith.addf %9, %14 : vector<2x128xf32>
    %16 = vector.extract_strided_slice %1 {offsets = [0, 2], sizes = [2, 1], strides = [1, 1]} : vector<2x4xf32> to vector<2x1xf32>
    %17 = vector.extract_strided_slice %0 {offsets = [2, 0], sizes = [1, 128], strides = [1, 1]} : vector<5x128xf32> to vector<1x128xf32>
    %18 = vector.broadcast %16 : vector<2x1xf32> to vector<2x128xf32>
    %19 = vector.broadcast %17 : vector<1x128xf32> to vector<2x128xf32>
    %20 = arith.mulf %18, %19 : vector<2x128xf32>
    %21 = arith.addf %15, %20 : vector<2x128xf32>
    %22 = vector.extract_strided_slice %1 {offsets = [0, 3], sizes = [2, 1], strides = [1, 1]} : vector<2x4xf32> to vector<2x1xf32>
    %23 = vector.extract_strided_slice %0 {offsets = [3, 0], sizes = [1, 128], strides = [1, 1]} : vector<5x128xf32> to vector<1x128xf32>
    %24 = vector.broadcast %22 : vector<2x1xf32> to vector<2x128xf32>
    %25 = vector.broadcast %23 : vector<1x128xf32> to vector<2x128xf32>
    %26 = arith.mulf %24, %25 : vector<2x128xf32>
    %27 = arith.addf %21, %26 : vector<2x128xf32>
    %28 = math.sin %27 : vector<2x128xf32>
    %c0_3 = arith.constant 0 : index
    %c0_4 = arith.constant 0 : index
    %29 = vector.load %arg3[%c0_3, %c0_4] : memref<2x128xf32, #tpu.memory_space<vmem>>, vector<2x128xf32>
    tpu.vector_store %arg3[%c0_3, %c0_4], %28 {strides = array<i32>} : memref<2x128xf32, #tpu.memory_space<vmem>>, vector<2x128xf32>,
    return
  }
  func.func @transform_0(%arg0: i32) -> (i32, i32) {
    %c0_i32 = arith.constant 0 : i32
    %c0_i32_0 = arith.constant 0 : i32
    return %arg0, %c0_i32 : i32, i32
  }
  func.func @transform_1(%arg0: i32) -> (i32, i32) {
    %c0_i32 = arith.constant 0 : i32
    %c0_i32_0 = arith.constant 0 : i32
    %c0_i32_1 = arith.constant 0 : i32
    return %c0_i32, %c0_i32_0 : i32, i32
  }
  func.func @transform_2(%arg0: i32) -> (i32, i32) {
    %c0_i32 = arith.constant 0 : i32
    %c0_i32_0 = arith.constant 0 : i32
    return %arg0, %c0_i32 : i32, i32
  }
}

</mosaic_0001>

<llo_original>
// kernel: tpu_custom_call.1
$region0: #{tpu_custom_call.1}
  #allocation0 [shape = 'u32[]', space=smem, size = 0x4, offset = 0x4, fixed_abs, tag = 'smem constant byte address 0x4 - core index']
  #allocation1 [shape = 'u32[144,128]{1,0:T(1,128)}', space=vmem, size = 0x12000, scoped, tag = 'internal scratch']
  %s0 = inlined_call_operand.hbm [shape: f32[2,4], index: 0, kind: input, shape index: {}]
  %s1 = inlined_call_operand.hbm [shape: f32[5,128], index: 1, kind: input, shape index: {}]
  %s2 = inlined_call_operand.hbm [shape: f32[2,128], index: 2, kind: output, shape index: {}]
  %s3 = sld [smem:[#allocation0]]
  $region26: #{tpu_custom_call.1} parent=0
    _
  %s5 = ssub.s32 1, %s3
  %s6 = scalar_select 0, %s5, %s3
  $region1: #{tpu_custom_call.1} parent=0
    #allocation2 [shape = 'u8[1024]{0}', space=vmem, size = 0x400, scoped, tag = 'input window, operand 0, single buffered']
    #allocation3 [shape = 's32[1]{0}', space=sflag, size = 0x4, scoped, tag = 'scoped memory for tpu_custom_call.1']
    #allocation4 [shape = 's32[1]{0}', space=sflag, size = 0x4, scoped, tag = 'scoped memory for tpu_custom_call.1']
    #allocation5 [shape = 'u8[4096]{0}', space=vmem, size = 0x1000, scoped, tag = 'input window, operand 1, single buffered']
    #allocation6 [shape = 's32[1]{0}', space=sflag, size = 0x4, scoped, tag = 'scoped memory for tpu_custom_call.1']
    #allocation7 [shape = 'u8[1024]{0}', space=vmem, size = 0x400, scoped, tag = 'output window, operand 0, single buffered']
    %7 = vsyncpa [#allocation3], 0
    %8 = vsyncpa [#allocation6], 0
    %9 = vsyncpa [#allocation4], 0
    // Predicated region
    $region2: #{tpu_custom_call.1} parent=1 // pred_check
      _
    $region3: #{tpu_custom_call.1} parent=1 // pred_check_branch
      %11 = sbr.rel (0) target = $region5
    $region4: #{tpu_custom_call.1} parent=1 // pred_region
      %s13 = ssub.s32 32, 32
      %14 = vsyncadd [#allocation3], %s13
      %s16 = sshll.u32 [#allocation2], 4
      %s17 = int_to_ptr.vmem [resolvable:$true] %s16
      %19 = dma.hbm_to_vmem [thread:$0]  %s0, 32, %s17, [#allocation3]
    $region5: #{tpu_custom_call.1} parent=1 // pred_fallthru
      _
    // Predicated region
    $region6: #{tpu_custom_call.1} parent=1 // pred_check
      _
    $region7: #{tpu_custom_call.1} parent=1 // pred_check_branch
      %21 = sbr.rel (0) target = $region9
    $region8: #{tpu_custom_call.1} parent=1 // pred_region
      %s23 = ssub.s32 128, 128
      %24 = vsyncadd [#allocation6], %s23
      %s26 = sshll.u32 [#allocation5], 4
      %s27 = int_to_ptr.vmem [resolvable:$true] %s26
      %29 = dma.hbm_to_vmem [thread:$0]  %s1, 128, %s27, [#allocation6]
    $region9: #{tpu_custom_call.1} parent=1 // pred_fallthru
      _
    // Predicated region
    $region10: #{tpu_custom_call.1} parent=1 // pred_check
      _
    $region11: #{tpu_custom_call.1} parent=1 // pred_check_branch
      %31 = sbr.rel (0) target = $region13
    $region12: #{tpu_custom_call.1} parent=1 // pred_region
      %32 = dma.done [#allocation3], 32
    $region13: #{tpu_custom_call.1} parent=1 // pred_fallthru
      _
    // Predicated region
    $region14: #{tpu_custom_call.1} parent=1 // pred_check
      _
    $region15: #{tpu_custom_call.1} parent=1 // pred_check_branch
      %34 = sbr.rel (0) target = $region17
    $region16: #{tpu_custom_call.1} parent=1 // pred_region
      %35 = dma.done [#allocation6], 128
    $region17: #{tpu_custom_call.1} parent=1 // pred_fallthru
      _
    %v36 = vld [vmem:[#allocation5] sm:$0x1f]
    %v37 = vld [vmem:[#allocation2] sm:$0x3]
    %39 = vset.pattern.permute.xlu0 0
    %40 = vperm.xlu0 %39, %v37
    %v41 = vpop.permute.xlu0 %40
    %v43 = vlaneseq
    %v44 = vshrl.u32 %v43, 7
    %v45 = vsub.s32 0, %v44
    %v46 = vrot.slane %v36, %v45
    %v47 = vmul.f32 %v41, %v46
    %v48 = vlaneseq
    %v49 = vshrl.u32 %v48, 7
    %v50 = vsub.s32 4, %v49
    %v51 = vrot.slane %v36, %v50
    %v52 = vadd.f32 %v51, %v47
    %53 = vset.pattern.permute.xlu0 1
    %54 = vperm.xlu0 %53, %v37
    %v55 = vpop.permute.xlu0 %54
    %v57 = vlaneseq
    %v58 = vshrl.u32 %v57, 7
    %v59 = vsub.s32 1, %v58
    %v60 = vrot.slane %v36, %v59
    %v61 = vmul.f32 %v55, %v60
    %v62 = vadd.f32 %v52, %v61
    %63 = vset.pattern.permute.xlu0 2
    %64 = vperm.xlu0 %63, %v37
    %v65 = vpop.permute.xlu0 %64
    %v67 = vlaneseq
    %v68 = vshrl.u32 %v67, 7
    %v69 = vsub.s32 2, %v68
    %v70 = vrot.slane %v36, %v69
    %v71 = vmul.f32 %v65, %v70
    %v72 = vadd.f32 %v62, %v71
    %73 = vset.pattern.permute.xlu0 3
    %74 = vperm.xlu0 %73, %v37
    %v75 = vpop.permute.xlu0 %74
    %v77 = vlaneseq
    %v78 = vshrl.u32 %v77, 7
    %v79 = vsub.s32 3, %v78
    %v80 = vrot.slane %v36, %v79
    %v81 = vmul.f32 %v75, %v80
    %v82 = vadd.f32 %v72, %v81
    %v83 = vand.u32 2147483647, %v82
    %vm84 = vcmp.le.f32.partialorder %v83, 0.7853982
    %vm85 = vcmp.lt.s32.totalorder %v82, 0
    %v86 = vand.u32 %v82, 2139095040
    %v87 = vshrl.u32 %v86, 23
    %v88 = vsub.s32 %v87, 127
    %v89 = vand.u32 2147483647, %v82
    %v90 = vand.u32 %v89, 8388607
    %v91 = vor.u32 %v90, 8388608
    %v92 = vsub.s32 0, %v91
    %v93 = vadd.s32 %v88, 1
    %vm94 = vcmp.gt.s32.totalorder %v93, 0
    %v95 = vsel %vm94, %v93, 0
    %v96 = vshrl.u32 %v95, 5
    %v97 = vand.u32 %v95, 31
    %v98 = vsub.s32 32, %v97
    %v99 = vshrl.u32 683565275, %v98
    %v100 = vshll.u32 683565275, %v97
    %v101 = vshrl.u32 2475754826, %v98
    %v102 = vor.u32 %v100, %v101
    %v103 = vshll.u32 2475754826, %v97
    %v104 = vshrl.u32 2131351028, %v98
    %v105 = vor.u32 %v103, %v104
    %v106 = vshll.u32 2131351028, %v97
    %v107 = vshrl.u32 2102212464, %v98
    %v108 = vor.u32 %v106, %v107
    %v109 = vshll.u32 2102212464, %v97
    %v110 = vshrl.u32 920167782, %v98
    %v111 = vor.u32 %v109, %v110
    %v112 = vshll.u32 920167782, %v97
    %v113 = vshrl.u32 1326507024, %v98
    %v114 = vor.u32 %v112, %v113
    %vm115 = vcmp.lt.s32.totalorder %v96, 1
    %vm116 = vcmp.lt.s32.totalorder %v96, 2
    %vm117 = vcmp.lt.s32.totalorder %v96, 3
    %vm118 = vcmp.lt.s32.totalorder %v96, 4
    %v119 = vsel %vm115, %v99, %v102
    %v120 = vsel %vm118, %v108, 2102212464
    %v121 = vsel %vm117, %v105, %v120
    %v122 = vsel %vm116, %v119, %v121
    %v123 = vsel %vm115, %v102, %v105
    %v124 = vsel %vm118, %v111, 920167782
    %v125 = vsel %vm117, %v108, %v124
    %v126 = vsel %vm116, %v123, %v125
    %v127 = vsel %vm115, %v105, %v108
    %v128 = vsel %vm118, %v114, 1326507024
    %v129 = vsel %vm117, %v111, %v128
    %v130 = vsel %vm116, %v127, %v129
    %v131 = vshll.u32 %v91, 8
    %v132 = vmul.u32.u64.compose %v131, %v130
    %v133 = vextract.low.u32 %v132
    %v134 = vextract.high.u32 %v132
    %v135 = vmul.u32.u64.compose %v131, %v126
    %v136 = vextract.low.u32 %v135
    %v137 = vextract.high.u32 %v135
    %v138 = vmul.u32 %v131, %v122
    %v139 = vadd.s32 %v134, %v136
    %vm140 = vc.u32 %v134, %v136
    %v141 = vadd.s32 %v137, 1
    %v142 = vsel %vm140, %v141, %v137
    %v143 = vadd.s32 %v138, %v142
    %v144 = vadd.s32 %v143, 536870912
    %v145 = vshrl.u32 %v144, 30
    %v146 = vshll.u32 %v145, 30
    %v147 = vsub.s32 %v143, %v146
    %vm148 = vcmp.lt.s32.totalorder %v147, 0
    %v149 = vsub.s32 0, %v147
    %v150 = vsel %vm148, %v149, %v147
    %v151 = vclz %v150
    %v152 = vsub.s32 %v151, 2
    %vm153 = vcmp.gt.s32.totalorder 0, %v152
    %v154 = vsel %vm153, 0, %v152
    %v155 = vsub.s32 32, %v154
    %v156 = vshll.u32 %v147, %v154
    %v157 = vshrl.u32 %v139, %v155
    %v158 = vor.u32 %v156, %v157
    %v159 = vsub.s32 4294967266, %v154
    %v160 = vadd.s32 %v159, 127
    %v161 = vshll.u32 %v160, 23
    %v162 = vor.u32 4788187, %v161
    %v163 = vand.u32 2147483647, %v162
    %v165 = vcvt.s32.f32 %v158
    %v166 = vmul.f32 %v165, %v163
    %v167 = vxor.u32 %v166, 2147483648
    %v168 = vsel %vm85, %v167, %v166
    %v169 = vsub.s32 4, %v145
    %v170 = vsel %vm85, %v169, %v145
    %v171 = vsel %vm84, %v82, %v168
    %v172 = vsel %vm84, 0, %v170
    %v173 = vcosq.f32.pop %v171
    %v174 = vsinq.f32.pop %v171
    %vm175 = vweird.f32 %v82
    %v176 = vadd.s32 %v172, 3
    %v177 = vand.u32 %v176, 3
    %vm178 = vcmp.lt.s32.totalorder %v177, 2
    %vm179 = vcmp.eq.s32.totalorder %v177, 0
    %v180 = vxor.u32 %v174, 2147483648
    %v181 = vsel %vm179, %v173, %v180
    %vm182 = vcmp.eq.s32.totalorder %v177, 2
    %v183 = vxor.u32 %v173, 2147483648
    %v184 = vsel %vm182, %v183, %v174
    %v185 = vsel %vm178, %v181, %v184
    %v186 = vsel %vm175, nan, %v185
    %187 = vst [vmem:[#allocation7] sm:$0x3] %v186
    // Predicated region
    $region18: #{tpu_custom_call.1} parent=1 // pred_check
      _
    $region19: #{tpu_custom_call.1} parent=1 // pred_check_branch
      %189 = sbr.rel (0) target = $region21
    $region20: #{tpu_custom_call.1} parent=1 // pred_region
      %s191 = ssub.s32 32, 32
      %192 = vsyncadd [#allocation4], %s191
      %s194 = sshll.u32 [#allocation7], 4
      %s195 = int_to_ptr.vmem [resolvable:$true] %s194
      %197 = dma.vmem_to_hbm [thread:$0]  %s195, 32, %s2, [#allocation4]
    $region21: #{tpu_custom_call.1} parent=1 // pred_fallthru
      _
    // Predicated region
    $region22: #{tpu_custom_call.1} parent=1 // pred_check
      _
    $region23: #{tpu_custom_call.1} parent=1 // pred_check_branch
      %199 = sbr.rel (0) target = $region25
    $region24: #{tpu_custom_call.1} parent=1 // pred_region
      %200 = dma.done [#allocation4], 32
    $region25: #{tpu_custom_call.1} parent=1 // pred_fallthru
      _
    %201 = vsyncpa [#allocation3], 1
    %202 = vsyncpa [#allocation6], 1
    %203 = vsyncpa [#allocation4], 1

</llo_original>
